<compile_context>
chip_gen: v5e
topology: v5e:2x2
jax: 0.10.0
libtpu: 0.0.40
codegen_flags: <defaults>
</compile_context>

<pallas_src>
import functools

import jax
import jax.numpy as jnp
from jax.experimental import pallas as pl
from jax.experimental.pallas import tpu as pltpu

_LANE = 128
_SUBLANE = 8


def _round_up(x, m):
    return ((x + m - 1) // m) * m


def _vmem_capacity_bytes():
    """Physical VMEM per TensorCore; conservative fallback if the query fails."""
    try:
        info = pltpu.get_tpu_info()
        cap = int(getattr(info, "vmem_capacity_bytes", 0))
        if cap > 0:
            return cap
    except Exception:
        pass
    return 64 * 1024 * 1024  # v7x-sized floor: safe on every generation


def _num_tensorcores():
    """2 TensorCores share the grid on v7x (and megacore v4/v5p); else 1."""
    try:
        kind = jax.devices()[0].device_kind.lower()
    except Exception:
        return 1
    if "v7" in kind or "v4" in kind or "v5p" in kind:
        return 2
    return 1


# ---------------------------------------------------------------------------
# Kernels
# ---------------------------------------------------------------------------
def _softmax_dim0_kernel(x_ref, o_ref):
    # Whole reduction axis (axis 0) resident; every column is an independent
    # lane.  Single f32 materialization of `e` is reused for sum and multiply.
    x = x_ref[...].astype(jnp.float32)
    m = jnp.max(x, axis=0, keepdims=True)          # (1, tile_d)
    e = jnp.exp(x - m)                              # f32, one live copy
    s = jnp.sum(e, axis=0, keepdims=True)           # (1, tile_d) f32
    o_ref[...] = (e / s).astype(o_ref.dtype)        # exact division


def _colstats_kernel(x_ref, m_ref, l_ref, *, n_rows, tile_n):
    # Online (streaming) max / sum-of-exp over the row axis.  The (1, tile_d)
    # outputs stay resident across the last ("arbitrary") N grid axis.
    i = pl.program_id(1)

    @pl.when(i == 0)
    def _():
        m_ref[...] = jnp.full_like(m_ref, -jnp.inf)
        l_ref[...] = jnp.zeros_like(l_ref)

    x = x_ref[...].astype(jnp.float32)
    row = jax.lax.broadcasted_iota(jnp.int32, x.shape, 0) + i * tile_n
    x = jnp.where(row < n_rows, x, -jnp.inf)         # mask padded tail rows

    m_prev = m_ref[...]
    m_new = jnp.maximum(m_prev, jnp.max(x, axis=0, keepdims=True))
    l_ref[...] = (l_ref[...] * jnp.exp(m_prev - m_new)
                  + jnp.sum(jnp.exp(x - m_new), axis=0, keepdims=True))
    m_ref[...] = m_new


def _normalize_kernel(x_ref, m_ref, l_ref, o_ref):
    e = jnp.exp(x_ref[...].astype(jnp.float32) - m_ref[...])
    o_ref[...] = (e / l_ref[...]).astype(o_ref.dtype)   # exact division


# ---------------------------------------------------------------------------
# Wrapper
# ---------------------------------------------------------------------------
def softmax_dim0(x, *, tile_d=None, tile_n=None, force_two_pass=False):
    """torch.softmax(x, dim=0) for a 2-D array [N, D] (per-column softmax)."""
    assert x.ndim == 2, "kernel expects a 2-D input [N, D]"
    N, D = x.shape
    in_bytes = jnp.dtype(x.dtype).itemsize
    num_tc = _num_tensorcores()

    # VMEM budget: generation-aware scoped limit (v7x has only 64 MiB physical,
    # leave room for Mosaic internal scratch), and a generous ~75% of it for
    # blocks -- the per-lane accounting below already includes double-buffering.
    vmem_cap = _vmem_capacity_bytes()
    if vmem_cap <= 64 * 1024 * 1024:
        vmem_limit = 40 * 1024 * 1024
    else:
        vmem_limit = int(min(vmem_cap, 128 * 1024 * 1024)) * 3 // 4
    buffer_budget = int(vmem_limit * 3 // 4)

    d_padded = _round_up(D, _LANE)

    # Single-pass feasibility: per-lane cost of one (N, tile_d) grid step --
    # 2x double-buffered input + 2x double-buffered output DMA tiles plus the
    # single f32 e intermediate (+ f32 cast of x).
    per_lane_bytes = N * (4 * in_bytes + 8)
    max_lanes = buffer_budget // per_lane_bytes
    single_pass = (not force_two_pass) and max_lanes >= min(D, _LANE)

    if single_pass:
        if tile_d is None:
            if D <= _LANE:
                tile_d = D                      # full last dim is legal for tiny D
            else:
                max_tile_d = max(_LANE, (max_lanes // _LANE) * _LANE)
                nb = pl.cdiv(d_padded, max_tile_d)
                if num_tc >= 2:
                    # Balanced, lane-aligned split so both TensorCores get
                    # (nearly) equal work; round block count to a multiple of
                    # the core count instead of shaving 128-lane slivers.
                    nb = max(nb, num_tc)
                    nb = _round_up(nb, num_tc)
                tile_d = _round_up(pl.cdiv(d_padded, nb), _LANE)
                tile_d = int(min(tile_d, max_tile_d, d_padded))
        grid = (pl.cdiv(D, tile_d),)
        return pl.pallas_call(
            _softmax_dim0_kernel,
            out_shape=jax.ShapeDtypeStruct((N, D), x.dtype),
            grid_spec=pltpu.PrefetchScalarGridSpec(
                num_scalar_prefetch=0,
                grid=grid,
                in_specs=[pl.BlockSpec((N, tile_d), lambda j: (0, j))],
                out_specs=pl.BlockSpec((N, tile_d), lambda j: (0, j)),
            ),
            compiler_params=pltpu.CompilerParams(
                dimension_semantics=("parallel",),
                vmem_limit_bytes=vmem_limit,
            ),
            cost_estimate=pl.CostEstimate(
                flops=4 * N * D,
                transcendentals=N * D,
                bytes_accessed=2 * N * D * in_bytes,
            ),
        )(x)

    # ---- two-pass (online column stats + normalize) for very large N ----
    # TODO(synk): fuse the stats + normalize passes into one pallas_call with a
    # nested pltpu.emit_pipeline to keep m/l in VMEM scratch (avoids one launch
    # and the (1, D) HBM round-trip).
    if tile_d is None:
        tile_d = int(min(2048, d_padded)) if D > _LANE else D
    if tile_n is None:
        per_elem = 4 * in_bytes + 12          # dbl-buffered in/out + f32 temps
        tile_n = buffer_budget // (max(tile_d, _LANE) * per_elem)
        tile_n = max(_SUBLANE, (tile_n // _SUBLANE) * _SUBLANE)
        tile_n = int(min(tile_n, _round_up(N, _SUBLANE)))

    nd = pl.cdiv(D, tile_d)
    nn = pl.cdiv(N, tile_n)

    m, l = pl.pallas_call(
        functools.partial(_colstats_kernel, n_rows=N, tile_n=tile_n),
        out_shape=(jax.ShapeDtypeStruct((1, D), jnp.float32),
                   jax.ShapeDtypeStruct((1, D), jnp.float32)),
        grid_spec=pltpu.PrefetchScalarGridSpec(
            num_scalar_prefetch=0,
            grid=(nd, nn),                     # reduction (N) axis last
            in_specs=[pl.BlockSpec((tile_n, tile_d), lambda j, i: (i, j))],
            out_specs=(pl.BlockSpec((1, tile_d), lambda j, i: (0, j)),
                       pl.BlockSpec((1, tile_d), lambda j, i: (0, j))),
        ),
        compiler_params=pltpu.CompilerParams(
            dimension_semantics=("parallel", "arbitrary"),
            vmem_limit_bytes=vmem_limit,
        ),
        cost_estimate=pl.CostEstimate(
            flops=4 * N * D,
            transcendentals=N * D,
            bytes_accessed=N * D * in_bytes + 8 * D,
        ),
    )(x)

    return pl.pallas_call(
        _normalize_kernel,
        out_shape=jax.ShapeDtypeStruct((N, D), x.dtype),
        grid_spec=pltpu.PrefetchScalarGridSpec(
            num_scalar_prefetch=0,
            grid=(nd, nn),
            in_specs=[pl.BlockSpec((tile_n, tile_d), lambda j, i: (i, j)),
                      pl.BlockSpec((1, tile_d), lambda j, i: (0, j)),
                      pl.BlockSpec((1, tile_d), lambda j, i: (0, j))],
            out_specs=pl.BlockSpec((tile_n, tile_d), lambda j, i: (i, j)),
        ),
        compiler_params=pltpu.CompilerParams(
            dimension_semantics=("parallel", "parallel"),
            vmem_limit_bytes=vmem_limit,
        ),
        cost_estimate=pl.CostEstimate(
            flops=2 * N * D,
            transcendentals=N * D,
            bytes_accessed=2 * N * D * in_bytes + 8 * D,
        ),
    )(x, m, l)


if __name__ == "__main__":
    key = jax.random.PRNGKey(0)
    k1, k2, k3 = jax.random.split(key, 3)

    # 1) single-pass path (small, tile-friendly shape).
    x1 = jax.random.normal(k1, (8, 256), dtype=jnp.float32)
    out1 = jax.block_until_ready(softmax_dim0(x1))
    ref1 = jax.nn.softmax(x1, axis=0)
    assert out1.shape == x1.shape and out1.dtype == x1.dtype
    assert jnp.allclose(out1, ref1, atol=1e-5, rtol=1e-5)
    assert jnp.allclose(jnp.sum(out1, axis=0), jnp.ones((256,)), atol=1e-4)

    # 2) two-pass (online-stats) fallback forced at a small shape; N not a
    #    multiple of the row tile and D not a multiple of 128 exercise masking.
    x2 = jax.random.normal(k2, (60, 200), dtype=jnp.float32)
    out2 = jax.block_until_ready(
        softmax_dim0(x2, tile_d=128, tile_n=16, force_two_pass=True))
    ref2 = jax.nn.softmax(x2, axis=0)
    assert jnp.allclose(out2, ref2, atol=1e-5, rtol=1e-5)
    assert jnp.allclose(jnp.sum(out2, axis=0), jnp.ones((200,)), atol=1e-4)

    # 3) bf16 input (math stays in f32, output cast back to bf16).
    x3 = jax.random.normal(k3, (16, 256), dtype=jnp.bfloat16)
    out3 = jax.block_until_ready(softmax_dim0(x3))
    ref3 = jax.nn.softmax(x3.astype(jnp.float32), axis=0)
    assert out3.dtype == jnp.bfloat16
    assert jnp.allclose(out3.astype(jnp.float32), ref3, atol=2e-2, rtol=2e-2)

    print("KERNEL_OK")
</pallas_src>

<mosaic_0001>
module attributes {stable_mosaic.version = 11 : i64} {
  func.func @_softmax_dim0_kernel(%arg0: i32, %arg1: memref<8x256xf32, #tpu.memory_space<vmem>>, %arg2: memref<8x256xf32, #tpu.memory_space<vmem>>) attributes {dimension_semantics = [#tpu.dimension_semantics<parallel>], iteration_bounds = array<i64: 1>, scalar_prefetch = 0 : i64, scratch_operands = 0 : i64, tpu.core_type = #tpu.core_type<tc>, window_params = [{transform_indices = @transform_0, window_bounds = array<i64: 8, 256>}, {transform_indices = @transform_1, window_bounds = array<i64: 8, 256>}]} {
    %c0 = arith.constant 0 : index
    %c0_0 = arith.constant 0 : index
    %0 = vector.load %arg1[%c0, %c0_0] : memref<8x256xf32, #tpu.memory_space<vmem>>, vector<8x256xf32>
    %cst = arith.constant dense<0xFF800000> : vector<256xf32>
    %1 = vector.multi_reduction <maximumf>, %0, %cst [0] : vector<8x256xf32> to vector<256xf32>
    %2 = vector.shape_cast %1 : vector<256xf32> to vector<1x256xf32>
    %3 = vector.broadcast %2 : vector<1x256xf32> to vector<8x256xf32>
    %4 = arith.subf %0, %3 : vector<8x256xf32>
    %5 = math.exp %4 : vector<8x256xf32>
    %cst_1 = arith.constant dense<0.000000e+00> : vector<256xf32>
    %6 = vector.multi_reduction <add>, %5, %cst_1 [0] : vector<8x256xf32> to vector<256xf32>
    %7 = vector.shape_cast %6 : vector<256xf32> to vector<1x256xf32>
    %8 = vector.broadcast %7 : vector<1x256xf32> to vector<8x256xf32>
    %9 = arith.divf %5, %8 : vector<8x256xf32>
    %c0_2 = arith.constant 0 : index
    %c0_3 = arith.constant 0 : index
    %10 = vector.load %arg2[%c0_2, %c0_3] : memref<8x256xf32, #tpu.memory_space<vmem>>, vector<8x256xf32>
    tpu.vector_store %arg2[%c0_2, %c0_3], %9 {strides = array<i32>} : memref<8x256xf32, #tpu.memory_space<vmem>>, vector<8x256xf32>,
    return
  }
  func.func @transform_0(%arg0: i32) -> (i32, i32) {
    %c0_i32 = arith.constant 0 : i32
    %c0_i32_0 = arith.constant 0 : i32
    return %c0_i32, %arg0 : i32, i32
  }
  func.func @transform_1(%arg0: i32) -> (i32, i32) {
    %c0_i32 = arith.constant 0 : i32
    %c0_i32_0 = arith.constant 0 : i32
    return %c0_i32, %arg0 : i32, i32
  }
}

</mosaic_0001>

<llo_original>
// kernel: tpu_custom_call.1
$region0: #{tpu_custom_call.1}
  #allocation0 [shape = 'u32[]', space=smem, size = 0x4, offset = 0x4, fixed_abs, tag = 'smem constant byte address 0x4 - core index']
  #allocation1 [shape = 'u32[72,128]{1,0:T(1,128)}', space=vmem, size = 0x9000, scoped, tag = 'internal scratch']
  %s0 = inlined_call_operand.hbm [shape: f32[8,256], index: 0, kind: input, shape index: {}]
  %s1 = inlined_call_operand.hbm [shape: f32[8,256], index: 1, kind: output, shape index: {}]
  %s2 = sld [smem:[#allocation0]]
  $region18: #{tpu_custom_call.1} parent=0
    _
  %s4 = ssub.s32 1, %s2
  %s5 = scalar_select 0, %s4, %s2
  $region1: #{tpu_custom_call.1} parent=0
    #allocation2 [shape = 'u8[8192]{0}', space=vmem, size = 0x2000, scoped, tag = 'input window, operand 0, single buffered']
    #allocation3 [shape = 's32[1]{0}', space=sflag, size = 0x4, scoped, tag = 'scoped memory for tpu_custom_call.1']
    #allocation4 [shape = 's32[1]{0}', space=sflag, size = 0x4, scoped, tag = 'scoped memory for tpu_custom_call.1']
    #allocation5 [shape = 'u8[8192]{0}', space=vmem, size = 0x2000, scoped, tag = 'output window, operand 0, single buffered']
    %6 = vsyncpa [#allocation3], 0
    %7 = vsyncpa [#allocation4], 0
    // Predicated region
    $region2: #{tpu_custom_call.1} parent=1 // pred_check
      _
    $region3: #{tpu_custom_call.1} parent=1 // pred_check_branch
      %9 = sbr.rel (0) target = $region5
    $region4: #{tpu_custom_call.1} parent=1 // pred_region
      %11 = vsyncadd [#allocation3], 0
      %s13 = sshll.u32 %s0, 4
      %s14 = int_to_ptr.hbm [resolvable:$true] %s13
      %s15 = sshll.u32 [#allocation2], 4
      %s16 = int_to_ptr.vmem [resolvable:$true] %s15
      %18 = dma.hbm_to_vmem [thread:$0]  %s14, 256, %s16, [#allocation3]
    $region5: #{tpu_custom_call.1} parent=1 // pred_fallthru
      _
    // Predicated region
    $region6: #{tpu_custom_call.1} parent=1 // pred_check
      _
    $region7: #{tpu_custom_call.1} parent=1 // pred_check_branch
      %20 = sbr.rel (0) target = $region9
    $region8: #{tpu_custom_call.1} parent=1 // pred_region
      %22 = dma.done [#allocation3], 256
    $region9: #{tpu_custom_call.1} parent=1 // pred_fallthru
      _
    %v23 = vld [vmem:[#allocation2] sm:$0xff]
    %v24 = vld [vmem:[#allocation2 + $0x8] sm:$0xff]
    %v25 = vrot.slane %v23, 4
    %v26 = vmax.f32 %v23, %v25
    %v27 = vrot.slane %v26, 2
    %v28 = vmax.f32 %v26, %v27
    %v29 = vrot.slane %v28, 1
    %v30 = vmax.f32 %v28, %v29
    %v31 = vrot.slane %v24, 4
    %v32 = vmax.f32 %v24, %v31
    %v33 = vrot.slane %v32, 2
    %v34 = vmax.f32 %v32, %v33
    %v35 = vrot.slane %v34, 1
    %v36 = vmax.f32 %v34, %v35
    %v37 = vsub.f32 %v23, %v30
    %v38 = vsub.f32 %v24, %v36
    %v39 = vmul.f32 %v37, 1.442695
    %v40 = vpow.pop %v39
    %v41 = vmul.f32 %v38, 1.442695
    %v42 = vpow.pop %v41
    %v43 = vrot.slane %v40, 4
    %v44 = vadd.f32 %v40, %v43
    %v45 = vrot.slane %v44, 2
    %v46 = vadd.f32 %v44, %v45
    %v47 = vrot.slane %v46, 1
    %v48 = vadd.f32 %v46, %v47
    %v49 = vrot.slane %v42, 4
    %v50 = vadd.f32 %v42, %v49
    %v51 = vrot.slane %v50, 2
    %v52 = vadd.f32 %v50, %v51
    %v53 = vrot.slane %v52, 1
    %v54 = vadd.f32 %v52, %v53
    %v55 = vrcp.pop %v48
    %v56 = vmul.f32 %v48, %v55
    %v57 = vsub.f32 1.0, %v56
    %v58 = vmul.f32 %v55, %v57
    %v59 = vadd.f32 %v55, %v58
    %vm60 = vweird.f32 %v48
    %vm61 = vweird.f32 %v55
    %vm62 = vmor %vm60, %vm61
    %v63 = vsel %vm62, %v55, %v59
    %v64 = vand.u32 2147483647, %v48
    %vm65 = vcmp.eq.f32.partialorder %v64, 8.507059e+37
    %v66 = vand.u32 %v48, 2147483648
    %v67 = vor.u32 1.1754944e-38, %v66
    %v68 = vsel %vm65, %v67, %v63
    %v69 = vmul.f32 %v40, %v68
    %v70 = vrcp.pop %v54
    %v71 = vmul.f32 %v54, %v70
    %v72 = vsub.f32 1.0, %v71
    %v73 = vmul.f32 %v70, %v72
    %v74 = vadd.f32 %v70, %v73
    %vm75 = vweird.f32 %v54
    %vm76 = vweird.f32 %v70
    %vm77 = vmor %vm75, %vm76
    %v78 = vsel %vm77, %v70, %v74
    %v79 = vand.u32 2147483647, %v54
    %vm80 = vcmp.eq.f32.partialorder %v79, 8.507059e+37
    %v81 = vand.u32 %v54, 2147483648
    %v82 = vor.u32 1.1754944e-38, %v81
    %v83 = vsel %vm80, %v82, %v78
    %v84 = vmul.f32 %v42, %v83
    %85 = vst [vmem:[#allocation5] sm:$0xff] %v69
    %86 = vst [vmem:[#allocation5 + $0x8] sm:$0xff] %v84
    // Predicated region
    $region10: #{tpu_custom_call.1} parent=1 // pred_check
      _
    $region11: #{tpu_custom_call.1} parent=1 // pred_check_branch
      %88 = sbr.rel (0) target = $region13
    $region12: #{tpu_custom_call.1} parent=1 // pred_region
      %90 = vsyncadd [#allocation4], 0
      %s92 = sshll.u32 [#allocation5], 4
      %s93 = int_to_ptr.vmem [resolvable:$true] %s92
      %s94 = sshll.u32 %s1, 4
      %s95 = int_to_ptr.hbm [resolvable:$true] %s94
      %97 = dma.vmem_to_hbm [thread:$0]  %s93, 256, %s95, [#allocation4]
    $region13: #{tpu_custom_call.1} parent=1 // pred_fallthru
      _
    // Predicated region
    $region14: #{tpu_custom_call.1} parent=1 // pred_check
      _
    $region15: #{tpu_custom_call.1} parent=1 // pred_check_branch
      %99 = sbr.rel (0) target = $region17
    $region16: #{tpu_custom_call.1} parent=1 // pred_region
      %101 = dma.done [#allocation4], 256
    $region17: #{tpu_custom_call.1} parent=1 // pred_fallthru
      _
    %102 = vsyncpa [#allocation3], 1
    %103 = vsyncpa [#allocation4], 1

</llo_original>
